<compile_context>
chip_gen: v6e
topology: v6e:2x2x1
jax: 0.10.0
libtpu: 0.0.40
codegen_flags: <defaults>
</compile_context>

<pallas_src>
import functools

import jax
import jax.numpy as jnp
from jax.experimental import pallas as pl
from jax.experimental.pallas import tpu as pltpu


def _round_up(x, m):
    return ((x + m - 1) // m) * m


# --------------------------------------------------------------------------
# Fast path: table resident in VMEM, one-hot MXU matmul gather.
# --------------------------------------------------------------------------

def _onehot_lookup_kernel(idx_ref, table_ref, out_ref):
    """out[r, :] = table[idx[r], :] via one-hot @ table on the MXU."""
    tr = idx_ref.shape[0]
    f = table_ref.shape[0]
    ids = idx_ref[...]                                          # (TR, 1) int32
    cols = jax.lax.broadcasted_iota(jnp.int32, (tr, f), 1)       # (TR, F)
    onehot = (ids == cols).astype(table_ref.dtype)               # bf16 table -> bf16 one-hot
    out_ref[...] = jnp.dot(
        onehot, table_ref[...], preferred_element_type=jnp.float32
    ).astype(out_ref.dtype)


def _onehot_mean_kernel(idx_ref, table_ref, out_ref, *, seq_len):
    """Per-batch mean over S: (1/S) * seg @ (onehot @ table), both on the MXU."""
    tbs = idx_ref.shape[0]                  # TB * S index rows in this block
    tb = out_ref.shape[0]                   # TB batches in this block
    f = table_ref.shape[0]

    ids = idx_ref[...]                                           # (TBS, 1)
    cols = jax.lax.broadcasted_iota(jnp.int32, (tbs, f), 1)
    onehot = (ids == cols).astype(table_ref.dtype)
    rows = jnp.dot(onehot, table_ref[...],
                   preferred_element_type=jnp.float32)            # (TBS, E) f32

    # seg[t, r] = 1/S  iff  t*S <= r < (t+1)*S   (compare-only, no int division)
    r_iota = jax.lax.broadcasted_iota(jnp.int32, (tb, tbs), 1)
    lo = jax.lax.broadcasted_iota(jnp.int32, (tb, tbs), 0) * seq_len
    seg = jnp.where((r_iota >= lo) & (r_iota < lo + seq_len),
                    jnp.float32(1.0 / seq_len), jnp.float32(0.0))  # (TB, TBS)
    out_ref[...] = jnp.dot(
        seg, rows, preferred_element_type=jnp.float32
    ).astype(out_ref.dtype)


def _lookup_fast(idx_flat, table, out_dtype):
    r = idx_flat.shape[0]
    f, e = table.shape
    tr = min(256, _round_up(r, 8))          # >= 8 sublane rows per output block
    r_pad = _round_up(r, tr)
    idx2 = jnp.pad(idx_flat, (0, r_pad - r)).reshape(r_pad, 1)
    out = pl.pallas_call(
        _onehot_lookup_kernel,
        out_shape=jax.ShapeDtypeStruct((r_pad, e), out_dtype),
        grid_spec=pltpu.PrefetchScalarGridSpec(
            num_scalar_prefetch=0,
            grid=(r_pad // tr,),
            in_specs=[
                pl.BlockSpec((tr, 1), lambda i: (i, 0)),    # index tile
                pl.BlockSpec((f, e), lambda i: (0, 0)),     # whole table, VMEM resident
            ],
            out_specs=pl.BlockSpec((tr, e), lambda i: (i, 0)),
        ),
        compiler_params=pltpu.CompilerParams(
            dimension_semantics=("parallel",)),               # row blocks split across TCs on v7x
    )(idx2, table)
    return out[:r]


def _mean_fast(idx, table, out_dtype):
    b, s = idx.shape
    f, e = table.shape
    tb = 8                                   # 8-row (sublane-dense) output blocks
    b_pad = _round_up(b, tb)
    idx2 = jnp.pad(idx, ((0, b_pad - b), (0, 0))).reshape(b_pad * s, 1)
    out = pl.pallas_call(
        functools.partial(_onehot_mean_kernel, seq_len=s),
        out_shape=jax.ShapeDtypeStruct((b_pad, e), out_dtype),
        grid_spec=pltpu.PrefetchScalarGridSpec(
            num_scalar_prefetch=0,
            grid=(b_pad // tb,),
            in_specs=[
                pl.BlockSpec((tb * s, 1), lambda i: (i, 0)),
                pl.BlockSpec((f, e), lambda i: (0, 0)),
            ],
            out_specs=pl.BlockSpec((tb, e), lambda i: (i, 0)),
        ),
        compiler_params=pltpu.CompilerParams(
            dimension_semantics=("parallel",)),
    )(idx2, table)
    return out[:b]


# --------------------------------------------------------------------------
# Fallback path: large vocab, manual batched row DMAs from HBM.
# --------------------------------------------------------------------------

def _dma_gather_kernel(idx_ref, table_ref, out_ref, buf_ref, sem_ref, *,
                       rows_per_step):
    # idx_ref  : (R_pad,) int32 in SMEM (scalar prefetch)
    # table_ref: (F, E) in HBM (memory_space=pl.ANY)
    # buf_ref  : (2*G, E) VMEM scratch (double buffer), sem_ref: (2,) DMA sems
    g = rows_per_step
    step = pl.program_id(0)
    nsteps = pl.num_programs(0)
    slot = step % 2

    def issue(block_idx, sl):
        base = block_idx * g

        @pl.loop(0, g)
        def _(r):
            row = idx_ref[base + r]
            pltpu.make_async_copy(
                table_ref.at[pl.ds(row, 1)],
                buf_ref.at[pl.ds(sl * g + r, 1)],
                sem_ref.at[sl],
            ).start()

    # Prime the pipeline, then always prefetch the *next* block's rows into
    # the other slot before waiting on the current slot.  This cross-step
    # handoff requires sequential grid iteration ("arbitrary" semantics).
    @pl.when(step == 0)
    def _():
        issue(0, 0)

    @pl.when(step + 1 < nsteps)
    def _():
        issue(step + 1, 1 - slot)

    # Wait for all G row copies of the current slot (one wait per issued copy).
    @pl.loop(0, g)
    def _(r):
        pltpu.make_async_copy(
            table_ref.at[pl.ds(0, 1)],
            buf_ref.at[pl.ds(slot * g + r, 1)],
            sem_ref.at[slot],
        ).wait()

    start = pl.multiple_of(slot * g, g)
    out_ref[...] = buf_ref[pl.ds(start, g), :]


def _dma_mean_kernel(idx_ref, table_ref, out_ref, buf_ref, sem_ref, acc_ref, *,
                     seq_len, batches_per_step):
    tb = batches_per_step
    inv_s = 1.0 / seq_len
    b0 = pl.program_id(0) * tb

    @pl.loop(0, tb)
    def _(t):
        base = (b0 + t) * seq_len

        @pl.loop(0, seq_len)
        def _(s):
            row = idx_ref[base + s]
            pltpu.make_async_copy(
                table_ref.at[pl.ds(row, 1)],
                buf_ref.at[pl.ds(s, 1)],
                sem_ref.at[0],
            ).start()

        @pl.loop(0, seq_len)
        def _(s):
            pltpu.make_async_copy(
                table_ref.at[pl.ds(0, 1)],
                buf_ref.at[pl.ds(s, 1)],
                sem_ref.at[0],
            ).wait()

        acc_ref[pl.ds(t, 1), :] = (
            jnp.sum(buf_ref[...].astype(jnp.float32), axis=0, keepdims=True)
            * inv_s)

    out_ref[...] = acc_ref[...].astype(out_ref.dtype)


def _lookup_dma(idx_flat, table, out_dtype, rows_per_step):
    r = idx_flat.shape[0]
    f, e = table.shape
    g = _round_up(min(rows_per_step, _round_up(r, 8)), 8)
    r_pad = _round_up(r, g)
    idx_p = jnp.pad(idx_flat, (0, r_pad - r))
    out = pl.pallas_call(
        functools.partial(_dma_gather_kernel, rows_per_step=g),
        out_shape=jax.ShapeDtypeStruct((r_pad, e), out_dtype),
        grid_spec=pltpu.PrefetchScalarGridSpec(
            num_scalar_prefetch=1,
            grid=(r_pad // g,),
            in_specs=[pl.BlockSpec(memory_space=pl.ANY)],     # table stays in HBM
            out_specs=pl.BlockSpec((g, e), lambda i, idx: (i, 0)),
            scratch_shapes=[
                pltpu.VMEM((2 * g, e), table.dtype),           # double-buffered rows
                pltpu.SemaphoreType.DMA((2,)),                 # one DMA sem per slot
            ],
        ),
        compiler_params=pltpu.CompilerParams(
            dimension_semantics=("arbitrary",),                # sequential: cross-step prefetch
            vmem_limit_bytes=32 * 1024 * 1024,                 # sized for v7x (64 MiB physical)
        ),
    )(idx_p, table)
    return out[:r]


def _mean_dma(idx, table, out_dtype):
    b, s = idx.shape
    f, e = table.shape
    tb = 8
    b_pad = _round_up(b, tb)
    idx_p = jnp.pad(idx, ((0, b_pad - b), (0, 0))).reshape(-1)
    out = pl.pallas_call(
        functools.partial(_dma_mean_kernel, seq_len=s, batches_per_step=tb),
        out_shape=jax.ShapeDtypeStruct((b_pad, e), out_dtype),
        grid_spec=pltpu.PrefetchScalarGridSpec(
            num_scalar_prefetch=1,
            grid=(b_pad // tb,),
            in_specs=[pl.BlockSpec(memory_space=pl.ANY)],
            out_specs=pl.BlockSpec((tb, e), lambda i, idx: (i, 0)),
            scratch_shapes=[
                pltpu.VMEM((s, e), table.dtype),               # S gathered rows of one batch
                pltpu.SemaphoreType.DMA((1,)),
                pltpu.VMEM((tb, e), jnp.float32),              # f32 accumulator
            ],
        ),
        compiler_params=pltpu.CompilerParams(
            dimension_semantics=("arbitrary",),
            vmem_limit_bytes=32 * 1024 * 1024,
        ),
    )(idx_p, table)
    return out[:b]


# --------------------------------------------------------------------------
# Public wrapper (dispatch)
# --------------------------------------------------------------------------

def embedding_unit_layer(X, table, meaning=True, *, force_dma=False,
                         rows_per_step=128):
    """Pallas equivalent of EmbeddingUnitLayer.forward(X, meaning)."""
    B, S = X.shape
    F, E = table.shape
    out_dtype = table.dtype

    # Clamp indices before any data-dependent DMA/gather: an OOB row DMA has
    # no runtime bounds check on TPU and would hard-fault the chip.
    idx = jnp.clip(X.astype(jnp.int32), 0, F - 1)

    table_bytes = F * E * table.dtype.itemsize
    # Table-resident fast path only when the table plus a >=8-row one-hot tile
    # comfortably fits VMEM (thresholds chosen for v7x's 64 MiB / 32 MiB
    # scoped-default VMEM; v5e/v6e have more headroom).
    fast = (not force_dma) and (F <= 2048) and (table_bytes <= 2 * 1024 * 1024)

    if meaning:
        fast = fast and (8 * S * F * 4) <= 4 * 1024 * 1024   # one-hot tile budget
        if fast:
            return _mean_fast(idx, table, out_dtype)
        return _mean_dma(idx, table, out_dtype)
    else:
        idx_flat = idx.reshape(-1)
        if fast:
            out = _lookup_fast(idx_flat, table, out_dtype)
        else:
            out = _lookup_dma(idx_flat, table, out_dtype, rows_per_step)
        return out.reshape(B, S, E)


if __name__ == "__main__":
    key = jax.random.PRNGKey(0)
    k_idx, k_w = jax.random.split(key)

    features_size, embedding_size = 64, 32    # nn.Embedding(features_size, embedding_size)
    batch, seq = 8, 16                        # X: (batch, seq) feature ids

    # torch.nn.init.normal_(weight, std=0.0001)
    table = (0.0001 * jax.random.normal(
        k_w, (features_size, embedding_size))).astype(jnp.float32)
    X = jax.random.randint(k_idx, (batch, seq), 0, features_size, dtype=jnp.int32)

    # Pure-JAX reference (exact torch semantics).
    ref_full = jnp.take(table, X, axis=0)
    ref_mean = jnp.mean(ref_full, axis=1)

    # ---- Default dispatch: table-resident one-hot MXU fast path ----
    out_mean = embedding_unit_layer(X, table, meaning=True)     # (B, E)
    out_full = embedding_unit_layer(X, table, meaning=False)    # (B, S, E)
    jax.block_until_ready((out_mean, out_full))
    assert out_mean.shape == (batch, embedding_size)
    assert out_full.shape == (batch, seq, embedding_size)
    # One-hot gather is exact up to MXU f32 matmul precision; tolerance also
    # covers a worst-case bf16-pass lowering while still catching wrong rows.
    assert jnp.allclose(out_full, ref_full, rtol=2e-2, atol=1e-6)
    assert jnp.allclose(out_mean, ref_mean, rtol=2e-2, atol=1e-6)

    # ---- Forced large-vocab fallback: manual batched row-DMA gather ----
    # rows_per_step=32 -> 4 grid steps, exercising the cross-step double
    # buffering; results are exact row copies / f32 sums -> strict tolerance.
    out_full_d = embedding_unit_layer(X, table, meaning=False,
                                      force_dma=True, rows_per_step=32)
    out_mean_d = embedding_unit_layer(X, table, meaning=True, force_dma=True)
    jax.block_until_ready((out_full_d, out_mean_d))
    assert jnp.allclose(out_full_d, ref_full, rtol=1e-5, atol=1e-8)
    assert jnp.allclose(out_mean_d, ref_mean, rtol=1e-5, atol=1e-8)

    print("KERNEL_OK")
</pallas_src>

<mosaic_0001>
module attributes {stable_mosaic.version = 11 : i64} {
  func.func @_onehot_mean_kernel(%arg0: i32, %arg1: memref<128x1xi32, #tpu.memory_space<vmem>>, %arg2: memref<64x32xf32, #tpu.memory_space<vmem>>, %arg3: memref<8x32xf32, #tpu.memory_space<vmem>>) attributes {dimension_semantics = [#tpu.dimension_semantics<parallel>], iteration_bounds = array<i64: 1>, scalar_prefetch = 0 : i64, scratch_operands = 0 : i64, tpu.core_type = #tpu.core_type<tc>, window_params = [{transform_indices = @transform_0, window_bounds = array<i64: 128, 1>}, {pipeline_mode = #tpu.pipeline_mode<synchronous>, transform_indices = @transform_1, window_bounds = array<i64: 64, 32>}, {transform_indices = @transform_2, window_bounds = array<i64: 8, 32>}]} {
    %c0 = arith.constant 0 : index
    %c0_0 = arith.constant 0 : index
    %0 = vector.load %arg1[%c0, %c0_0] : memref<128x1xi32, #tpu.memory_space<vmem>>, vector<128x1xi32>
    %1 = tpu.iota {dimensions = array<i32: 1>} : vector<128x64xi32>
    %2 = vector.broadcast %0 : vector<128x1xi32> to vector<128x64xi32>
    %3 = arith.cmpi eq, %2, %1 : vector<128x64xi32>
    %4 = arith.extui %3 : vector<128x64xi1> to vector<128x64xi32>
    %5 = arith.sitofp %4 : vector<128x64xi32> to vector<128x64xf32>
    %c0_1 = arith.constant 0 : index
    %c0_2 = arith.constant 0 : index
    %6 = vector.load %arg2[%c0_1, %c0_2] : memref<64x32xf32, #tpu.memory_space<vmem>>, vector<64x32xf32>
    %cst = arith.constant dense<0.000000e+00> : vector<128x32xf32>
    %7 = tpu.matmul %5, %6, %cst {dimension_numbers = #tpu.dot_dimension_numbers<[1], [0], [0], [1], [0, 0, 1, 1], [], []>} : vector<128x64xf32>, vector<64x32xf32>, vector<128x32xf32> -> vector<128x32xf32>
    %8 = tpu.iota {dimensions = array<i32: 1>} : vector<8x128xi32>
    %9 = tpu.iota {dimensions = array<i32: 0>} : vector<8x128xi32>
    %c16_i32 = arith.constant 16 : i32
    %10 = vector.broadcast %c16_i32 : i32 to vector<8x128xi32>
    %11 = arith.muli %9, %10 : vector<8x128xi32>
    %12 = arith.cmpi sge, %8, %11 : vector<8x128xi32>
    %c16_i32_3 = arith.constant 16 : i32
    %13 = vector.broadcast %c16_i32_3 : i32 to vector<8x128xi32>
    %14 = arith.addi %11, %13 : vector<8x128xi32>
    %15 = arith.cmpi slt, %8, %14 : vector<8x128xi32>
    %16 = arith.andi %12, %15 : vector<8x128xi1>
    %cst_4 = arith.constant 6.250000e-02 : f32
    %cst_5 = arith.constant 0.000000e+00 : f32
    %17 = vector.broadcast %cst_4 : f32 to vector<8x128xf32>
    %18 = vector.broadcast %cst_5 : f32 to vector<8x128xf32>
    %19 = arith.select %16, %17, %18 : vector<8x128xi1>, vector<8x128xf32>
    %cst_6 = arith.constant dense<0.000000e+00> : vector<8x32xf32>
    %20 = tpu.matmul %19, %7, %cst_6 {dimension_numbers = #tpu.dot_dimension_numbers<[1], [0], [0], [1], [0, 0, 1, 1], [], []>} : vector<8x128xf32>, vector<128x32xf32>, vector<8x32xf32> -> vector<8x32xf32>
    %c0_7 = arith.constant 0 : index
    %c0_8 = arith.constant 0 : index
    %21 = vector.load %arg3[%c0_7, %c0_8] : memref<8x32xf32, #tpu.memory_space<vmem>>, vector<8x32xf32>
    tpu.vector_store %arg3[%c0_7, %c0_8], %20 {strides = array<i32>} : memref<8x32xf32, #tpu.memory_space<vmem>>, vector<8x32xf32>,
    return
  }
  func.func @transform_0(%arg0: i32) -> (i32, i32) {
    %c0_i32 = arith.constant 0 : i32
    %c0_i32_0 = arith.constant 0 : i32
    return %arg0, %c0_i32 : i32, i32
  }
  func.func @transform_1(%arg0: i32) -> (i32, i32) {
    %c0_i32 = arith.constant 0 : i32
    %c0_i32_0 = arith.constant 0 : i32
    %c0_i32_1 = arith.constant 0 : i32
    return %c0_i32, %c0_i32_0 : i32, i32
  }
  func.func @transform_2(%arg0: i32) -> (i32, i32) {
    %c0_i32 = arith.constant 0 : i32
    %c0_i32_0 = arith.constant 0 : i32
    return %arg0, %c0_i32 : i32, i32
  }
}

</mosaic_0001>

<llo_original>
// kernel: tpu_custom_call.1
$region0: #{tpu_custom_call.1}
  #allocation0 [shape = 'u32[]', space=smem, size = 0x4, offset = 0x4, fixed_abs, tag = 'smem constant byte address 0x4 - core index']
  #allocation1 [shape = 'u32[144,128]{1,0:T(1,128)}', space=vmem, size = 0x12000, scoped, tag = 'internal scratch']
  %s0 = inlined_call_operand.vmem [shape: s32[128,1], index: 0, kind: input, shape index: {}]
  %s1 = inlined_call_operand.vmem [shape: f32[64,32], index: 1, kind: input, shape index: {}]
  %s2 = inlined_call_operand.hbm [shape: f32[8,32], index: 2, kind: output, shape index: {}]
  %s3 = sld [smem:[#allocation0]]
  $region18: #{tpu_custom_call.1} parent=0
    _
  %s5 = ssub.s32 1, %s3
  %s6 = scalar_select 0, %s5, %s3
  $region1: #{tpu_custom_call.1} parent=0
    #allocation2 [shape = 'u8[4096]{0}', space=vmem, size = 0x1000, scoped, tag = 'output window, operand 0, single buffered']
    #allocation3 [shape = 's32[1]{0}', space=sflag, size = 0x4, scoped, tag = 'scoped memory for tpu_custom_call.1']
    %7 = vsyncpa [#allocation3], 0
    // Predicated region
    $region2: #{tpu_custom_call.1} parent=1 // pred_check
      _
    $region3: #{tpu_custom_call.1} parent=1 // pred_check_branch
      %9 = sbr.rel (0) target = $region5
    $region4: #{tpu_custom_call.1} parent=1 // pred_region
      _
    $region5: #{tpu_custom_call.1} parent=1 // pred_fallthru
      _
    // Predicated region
    $region6: #{tpu_custom_call.1} parent=1 // pred_check
      _
    $region7: #{tpu_custom_call.1} parent=1 // pred_check_branch
      %11 = sbr.rel (0) target = $region9
    $region8: #{tpu_custom_call.1} parent=1 // pred_region
      _
    $region9: #{tpu_custom_call.1} parent=1 // pred_fallthru
      _
    %v12 = vld [vmem:[%s0] sm:$0xff]
    %v13 = vld [vmem:[%s0 + $0x8] sm:$0xff]
    %v14 = vld [vmem:[%s0 + $0x10] sm:$0xff]
    %v15 = vld [vmem:[%s0 + $0x18] sm:$0xff]
    %v16 = vld [vmem:[%s0 + $0x20] sm:$0xff]
    %v17 = vld [vmem:[%s0 + $0x28] sm:$0xff]
    %v18 = vld [vmem:[%s0 + $0x30] sm:$0xff]
    %v19 = vld [vmem:[%s0 + $0x38] sm:$0xff]
    %v20 = vld [vmem:[%s0 + $0x40] sm:$0xff]
    %v21 = vld [vmem:[%s0 + $0x48] sm:$0xff]
    %v22 = vld [vmem:[%s0 + $0x50] sm:$0xff]
    %v23 = vld [vmem:[%s0 + $0x58] sm:$0xff]
    %v24 = vld [vmem:[%s0 + $0x60] sm:$0xff]
    %v25 = vld [vmem:[%s0 + $0x68] sm:$0xff]
    %v26 = vld [vmem:[%s0 + $0x70] sm:$0xff]
    %v27 = vld [vmem:[%s0 + $0x78] sm:$0xff]
    %v28 = vlaneseq
    %v29 = vand.u32 %v28, 127
    %30 = vset.pattern.permute.xlu0 0
    %31 = vperm.xlu0 %30, %v12
    %v32 = vpop.permute.xlu0 %31
    %33 = vset.pattern.permute.xlu0 0
    %34 = vperm.xlu0 %33, %v13
    %v35 = vpop.permute.xlu0 %34
    %36 = vset.pattern.permute.xlu0 0
    %37 = vperm.xlu0 %36, %v14
    %v38 = vpop.permute.xlu0 %37
    %39 = vset.pattern.permute.xlu0 0
    %40 = vperm.xlu0 %39, %v15
    %v41 = vpop.permute.xlu0 %40
    %42 = vset.pattern.permute.xlu0 0
    %43 = vperm.xlu0 %42, %v16
    %v44 = vpop.permute.xlu0 %43
    %45 = vset.pattern.permute.xlu0 0
    %46 = vperm.xlu0 %45, %v17
    %v47 = vpop.permute.xlu0 %46
    %48 = vset.pattern.permute.xlu0 0
    %49 = vperm.xlu0 %48, %v18
    %v50 = vpop.permute.xlu0 %49
    %51 = vset.pattern.permute.xlu0 0
    %52 = vperm.xlu0 %51, %v19
    %v53 = vpop.permute.xlu0 %52
    %54 = vset.pattern.permute.xlu0 0
    %55 = vperm.xlu0 %54, %v20
    %v56 = vpop.permute.xlu0 %55
    %57 = vset.pattern.permute.xlu0 0
    %58 = vperm.xlu0 %57, %v21
    %v59 = vpop.permute.xlu0 %58
    %60 = vset.pattern.permute.xlu0 0
    %61 = vperm.xlu0 %60, %v22
    %v62 = vpop.permute.xlu0 %61
    %63 = vset.pattern.permute.xlu0 0
    %64 = vperm.xlu0 %63, %v23
    %v65 = vpop.permute.xlu0 %64
    %66 = vset.pattern.permute.xlu0 0
    %67 = vperm.xlu0 %66, %v24
    %v68 = vpop.permute.xlu0 %67
    %69 = vset.pattern.permute.xlu0 0
    %70 = vperm.xlu0 %69, %v25
    %v71 = vpop.permute.xlu0 %70
    %72 = vset.pattern.permute.xlu0 0
    %73 = vperm.xlu0 %72, %v26
    %v74 = vpop.permute.xlu0 %73
    %75 = vset.pattern.permute.xlu0 0
    %76 = vperm.xlu0 %75, %v27
    %v77 = vpop.permute.xlu0 %76
    %vm78 = vcmp.eq.s32.totalorder %v32, %v29
    %vm79 = vcmp.eq.s32.totalorder %v35, %v29
    %vm80 = vcmp.eq.s32.totalorder %v38, %v29
    %vm81 = vcmp.eq.s32.totalorder %v41, %v29
    %vm82 = vcmp.eq.s32.totalorder %v44, %v29
    %vm83 = vcmp.eq.s32.totalorder %v47, %v29
    %vm84 = vcmp.eq.s32.totalorder %v50, %v29
    %vm85 = vcmp.eq.s32.totalorder %v53, %v29
    %vm86 = vcmp.eq.s32.totalorder %v56, %v29
    %vm87 = vcmp.eq.s32.totalorder %v59, %v29
    %vm88 = vcmp.eq.s32.totalorder %v62, %v29
    %vm89 = vcmp.eq.s32.totalorder %v65, %v29
    %vm90 = vcmp.eq.s32.totalorder %v68, %v29
    %vm91 = vcmp.eq.s32.totalorder %v71, %v29
    %vm92 = vcmp.eq.s32.totalorder %v74, %v29
    %vm93 = vcmp.eq.s32.totalorder %v77, %v29
    %v94 = vsel %vm78, 1, 0
    %v95 = vsel %vm79, 1, 0
    %v96 = vsel %vm80, 1, 0
    %v97 = vsel %vm81, 1, 0
    %v98 = vsel %vm82, 1, 0
    %v99 = vsel %vm83, 1, 0
    %v100 = vsel %vm84, 1, 0
    %v101 = vsel %vm85, 1, 0
    %v102 = vsel %vm86, 1, 0
    %v103 = vsel %vm87, 1, 0
    %v104 = vsel %vm88, 1, 0
    %v105 = vsel %vm89, 1, 0
    %v106 = vsel %vm90, 1, 0
    %v107 = vsel %vm91, 1, 0
    %v108 = vsel %vm92, 1, 0
    %v109 = vsel %vm93, 1, 0
    %v110 = vcvt.s32.f32 %v94
    %v111 = vcvt.s32.f32 %v95
    %v112 = vcvt.s32.f32 %v96
    %v113 = vcvt.s32.f32 %v97
    %v114 = vcvt.s32.f32 %v98
    %v115 = vcvt.s32.f32 %v99
    %v116 = vcvt.s32.f32 %v100
    %v117 = vcvt.s32.f32 %v101
    %v118 = vcvt.s32.f32 %v102
    %v119 = vcvt.s32.f32 %v103
    %v120 = vcvt.s32.f32 %v104
    %v121 = vcvt.s32.f32 %v105
    %v122 = vcvt.s32.f32 %v106
    %v123 = vcvt.s32.f32 %v107
    %v124 = vcvt.s32.f32 %v108
    %v125 = vcvt.s32.f32 %v109
    %v126 = vld [vmem:[%s1] sm:$0xff]
    %v127 = vld [vmem:[%s1 + $0x8] sm:$0xff]
    %v128 = vld [vmem:[%s1 + $0x10] sm:$0xff]
    %v129 = vld [vmem:[%s1 + $0x18] sm:$0xff]
    %v130 = vld [vmem:[%s1 + $0x20] sm:$0xff]
    %v131 = vld [vmem:[%s1 + $0x28] sm:$0xff]
    %v132 = vld [vmem:[%s1 + $0x30] sm:$0xff]
    %v133 = vld [vmem:[%s1 + $0x38] sm:$0xff]
    %vm134 = vcmask 523264
    %v136 = vsel %vm134, %v110, 0
    %v139 = vsel %vm134, %v111, 0
    %v142 = vsel %vm134, %v112, 0
    %v145 = vsel %vm134, %v113, 0
    %v148 = vsel %vm134, %v114, 0
    %v151 = vsel %vm134, %v115, 0
    %v154 = vsel %vm134, %v116, 0
    %v157 = vsel %vm134, %v117, 0
    %v160 = vsel %vm134, %v118, 0
    %v163 = vsel %vm134, %v119, 0
    %v166 = vsel %vm134, %v120, 0
    %v169 = vsel %vm134, %v121, 0
    %v172 = vsel %vm134, %v122, 0
    %v175 = vsel %vm134, %v123, 0
    %v178 = vsel %vm134, %v124, 0
    %v181 = vsel %vm134, %v125, 0
    %183 = vmatprep.subr.mxu0 0.0
    %184 = vmatpush1.msra.mxu0 0.0
    %185 = vmatprep.subr.mxu0 0.0
    %186 = vmatpush1.msra.mxu0 0.0
    %187 = vmatprep.subr.mxu0 0.0
    %188 = vmatpush1.msra.mxu0 0.0
    %189 = vmatprep.subr.mxu0 0.0
    %190 = vmatpush1.msra.mxu0 0.0
    %191 = vmatprep.subr.mxu0 0.0
    %192 = vmatpush1.msra.mxu0 0.0
    %193 = vmatprep.subr.mxu0 0.0
    %194 = vmatpush1.msra.mxu0 0.0
    %195 = vmatprep.subr.mxu0 0.0
    %196 = vmatpush1.msra.mxu0 0.0
    %197 = vmatprep.subr.mxu0 0.0
    %198 = vmatpush1.msra.mxu0 0.0
    %199 = vmatprep.subr.mxu0 0.0
    %200 = vmatpush1.msra.mxu0 %v133
    %201 = vmatprep.subr.mxu0 0.0
    %202 = vmatpush1.msra.mxu0 %v132
    %203 = vmatprep.subr.mxu0 0.0
    %204 = vmatpush1.msra.mxu0 %v131
    %205 = vmatprep.subr.mxu0 0.0
    %206 = vmatpush1.msra.mxu0 %v130
    %207 = vmatprep.subr.mxu0 0.0
    %208 = vmatpush1.msra.mxu0 %v129
    %209 = vmatprep.subr.mxu0 0.0
    %210 = vmatpush1.msra.mxu0 %v128
    %211 = vmatprep.subr.mxu0 0.0
    %212 = vmatpush1.msra.mxu0 %v127
    %213 = vmatprep.subr.mxu0 0.0
    %214 = vmatpush1.msra.mxu0 %v126
    %215 = vmatprep.subr.mxu0 0.0
    %216 = vmatpush2.msra.mxu0 0.0
    %217 = vmatprep.subr.mxu0 0.0
    %218 = vmatpush2.msra.mxu0 0.0
    %219 = vmatprep.subr.mxu0 0.0
    %220 = vmatpush2.msra.mxu0 0.0
    %221 = vmatprep.subr.mxu0 0.0
    %222 = vmatpush2.msra.mxu0 0.0
    %223 = vmatprep.subr.mxu0 0.0
    %224 = vmatpush2.msra.mxu0 0.0
    %225 = vmatprep.subr.mxu0 0.0
    %226 = vmatpush2.msra.mxu0 0.0
    %227 = vmatprep.subr.mxu0 0.0
    %228 = vmatpush2.msra.mxu0 0.0
    %229 = vmatprep.subr.mxu0 0.0
    %230 = vmatpush2.msra.mxu0 0.0
    %231 = vmatprep.subr.mxu0 0.0
    %232 = vmatpush2.msra.mxu0 0.0
    %233 = vmatprep.subr.mxu0 0.0
    %234 = vmatpush2.msra.mxu0 0.0
    %235 = vmatprep.subr.mxu0 0.0
    %236 = vmatpush2.msra.mxu0 0.0
    %237 = vmatprep.subr.mxu0 0.0
    %238 = vmatpush2.msra.mxu0 0.0
    %239 = vmatprep.subr.mxu0 0.0
    %240 = vmatpush2.msra.mxu0 0.0
    %241 = vmatprep.subr.mxu0 0.0
    %242 = vmatpush2.msra.mxu0 0.0
    %243 = vmatprep.subr.mxu0 0.0
    %244 = vmatpush2.msra.mxu0 0.0
    %245 = vmatprep.subr.mxu0 0.0
    %246 = vmatpush2.msra.mxu0 0.0
    %247 = vmatprep.mubr.f32.mxu0 0.0
    %248 = vmatmul.mubr.f32.gmra.mxu0 %v136
    %v249 = vpop.f32.mrf.mxu0
    %v250 = vadd.f32 0.0, %v249
    %v251 = vpop.f32.mrf.mxu0
    %252 = vmatprep.mubr.f32.mxu0 0.0
    %253 = vmatmul.mubr.f32.gmra.mxu0 %v139
    %v254 = vpop.f32.mrf.mxu0
    %v255 = vadd.f32 0.0, %v254
    %v256 = vpop.f32.mrf.mxu0
    %257 = vmatprep.mubr.f32.mxu0 0.0
    %258 = vmatmul.mubr.f32.gmra.mxu0 %v142
    %v259 = vpop.f32.mrf.mxu0
    %v260 = vadd.f32 0.0, %v259
    %v261 = vpop.f32.mrf.mxu0
    %262 = vmatprep.mubr.f32.mxu0 0.0
    %263 = vmatmul.mubr.f32.gmra.mxu0 %v145
    %v264 = vpop.f32.mrf.mxu0
    %v265 = vadd.f32 0.0, %v264
    %v266 = vpop.f32.mrf.mxu0
    %267 = vmatprep.mubr.f32.mxu0 0.0
    %268 = vmatmul.mubr.f32.gmra.mxu0 %v148
    %v269 = vpop.f32.mrf.mxu0
    %v270 = vadd.f32 0.0, %v269
    %v271 = vpop.f32.mrf.mxu0
    %272 = vmatprep.mubr.f32.mxu0 0.0
    %273 = vmatmul.mubr.f32.gmra.mxu0 %v151
    %v274 = vpop.f32.mrf.mxu0
    %v275 = vadd.f32 0.0, %v274
    %v276 = vpop.f32.mrf.mxu0
    %277 = vmatprep.mubr.f32.mxu0 0.0
    %278 = vmatmul.mubr.f32.gmra.mxu0 %v154
    %v279 = vpop.f32.mrf.mxu0
    %v280 = vadd.f32 0.0, %v279
    %v281 = vpop.f32.mrf.mxu0
    %282 = vmatprep.mubr.f32.mxu0 0.0
    %283 = vmatmul.mubr.f32.gmra.mxu0 %v157
    %v284 = vpop.f32.mrf.mxu0
    %v285 = vadd.f32 0.0, %v284
    %v286 = vpop.f32.mrf.mxu0
    %287 = vmatprep.mubr.f32.mxu0 0.0
    %288 = vmatmul.mubr.f32.gmra.mxu0 %v160
    %v289 = vpop.f32.mrf.mxu0
    %v290 = vadd.f32 0.0, %v289
    %v291 = vpop.f32.mrf.mxu0
    %292 = vmatprep.mubr.f32.mxu0 0.0
    %293 = vmatmul.mubr.f32.gmra.mxu0 %v163
    %v294 = vpop.f32.mrf.mxu0
    %v295 = vadd.f32 0.0, %v294
    %v296 = vpop.f32.mrf.mxu0
    %297 = vmatprep.mubr.f32.mxu0 0.0
    %298 = vmatmul.mubr.f32.gmra.mxu0 %v166
    %v299 = vpop.f32.mrf.mxu0
    %v300 = vadd.f32 0.0, %v299
    %v301 = vpop.f32.mrf.mxu0
    %302 = vmatprep.mubr.f32.mxu0 0.0
    %303 = vmatmul.mubr.f32.gmra.mxu0 %v169
    %v304 = vpop.f32.mrf.mxu0
    %v305 = vadd.f32 0.0, %v304
    %v306 = vpop.f32.mrf.mxu0
    %307 = vmatprep.mubr.f32.mxu0 0.0
    %308 = vmatmul.mubr.f32.gmra.mxu0 %v172
    %v309 = vpop.f32.mrf.mxu0
    %v310 = vadd.f32 0.0, %v309
    %v311 = vpop.f32.mrf.mxu0
    %312 = vmatprep.mubr.f32.mxu0 0.0
    %313 = vmatmul.mubr.f32.gmra.mxu0 %v175
    %v314 = vpop.f32.mrf.mxu0
    %v315 = vadd.f32 0.0, %v314
    %v316 = vpop.f32.mrf.mxu0
    %317 = vmatprep.mubr.f32.mxu0 0.0
    %318 = vmatmul.mubr.f32.gmra.mxu0 %v178
    %v319 = vpop.f32.mrf.mxu0
    %v320 = vadd.f32 0.0, %v319
    %v321 = vpop.f32.mrf.mxu0
    %322 = vmatprep.mubr.f32.mxu0 0.0
    %323 = vmatmul.mubr.f32.gmra.mxu0 %v181
    %v324 = vpop.f32.mrf.mxu0
    %v325 = vadd.f32 0.0, %v324
    %v326 = vpop.f32.mrf.mxu0
    %327 = vdwg.mxu0
    %v328 = vlaneseq
    %v329 = vshrl.u32 %v328, 7
    %v330 = vmul.u32 %v329, 16
    %vm331 = vcmp.ge.s32.totalorder %v29, %v330
    %v332 = vadd.s32 %v330, 16
    %vm333 = vcmp.lt.s32.totalorder %v29, %v332
    %vm334 = vmand %vm331, %vm333
    %v335 = vsel %vm334, 0.0625, 0.0
    %336 = vmatprep.subr.mxu0 0.0
    %337 = vmatpush1.msra.mxu0 %v325
    %338 = vmatprep.subr.mxu0 0.0
    %339 = vmatpush1.msra.mxu0 %v320
    %340 = vmatprep.subr.mxu0 0.0
    %341 = vmatpush1.msra.mxu0 %v315
    %342 = vmatprep.subr.mxu0 0.0
    %343 = vmatpush1.msra.mxu0 %v310
    %344 = vmatprep.subr.mxu0 0.0
    %345 = vmatpush1.msra.mxu0 %v305
    %346 = vmatprep.subr.mxu0 0.0
    %347 = vmatpush1.msra.mxu0 %v300
    %348 = vmatprep.subr.mxu0 0.0
    %349 = vmatpush1.msra.mxu0 %v295
    %350 = vmatprep.subr.mxu0 0.0
    %351 = vmatpush1.msra.mxu0 %v290
    %352 = vmatprep.subr.mxu0 0.0
    %353 = vmatpush1.msra.mxu0 %v285
    %354 = vmatprep.subr.mxu0 0.0
    %355 = vmatpush1.msra.mxu0 %v280
    %356 = vmatprep.subr.mxu0 0.0
    %357 = vmatpush1.msra.mxu0 %v275
    %358 = vmatprep.subr.mxu0 0.0
    %359 = vmatpush1.msra.mxu0 %v270
    %360 = vmatprep.subr.mxu0 0.0
    %361 = vmatpush1.msra.mxu0 %v265
    %362 = vmatprep.subr.mxu0 0.0
    %363 = vmatpush1.msra.mxu0 %v260
    %364 = vmatprep.subr.mxu0 0.0
    %365 = vmatpush1.msra.mxu0 %v255
    %366 = vmatprep.subr.mxu0 0.0
    %367 = vmatpush1.msra.mxu0 %v250
    %368 = vmatprep.subr.mxu0 0.0
    %369 = vmatpush2.msra.mxu0 0.0
    %370 = vmatprep.subr.mxu0 0.0
    %371 = vmatpush2.msra.mxu0 0.0
    %372 = vmatprep.subr.mxu0 0.0
    %373 = vmatpush2.msra.mxu0 0.0
    %374 = vmatprep.subr.mxu0 0.0
    %375 = vmatpush2.msra.mxu0 0.0
    %376 = vmatprep.subr.mxu0 0.0
    %377 = vmatpush2.msra.mxu0 0.0
    %378 = vmatprep.subr.mxu0 0.0
    %379 = vmatpush2.msra.mxu0 0.0
    %380 = vmatprep.subr.mxu0 0.0
    %381 = vmatpush2.msra.mxu0 0.0
    %382 = vmatprep.subr.mxu0 0.0
    %383 = vmatpush2.msra.mxu0 0.0
    %384 = vmatprep.subr.mxu0 0.0
    %385 = vmatpush2.msra.mxu0 0.0
    %386 = vmatprep.subr.mxu0 0.0
    %387 = vmatpush2.msra.mxu0 0.0
    %388 = vmatprep.subr.mxu0 0.0
    %389 = vmatpush2.msra.mxu0 0.0
    %390 = vmatprep.subr.mxu0 0.0
    %391 = vmatpush2.msra.mxu0 0.0
    %392 = vmatprep.subr.mxu0 0.0
    %393 = vmatpush2.msra.mxu0 0.0
    %394 = vmatprep.subr.mxu0 0.0
    %395 = vmatpush2.msra.mxu0 0.0
    %396 = vmatprep.subr.mxu0 0.0
    %397 = vmatpush2.msra.mxu0 0.0
    %398 = vmatprep.subr.mxu0 0.0
    %399 = vmatpush2.msra.mxu0 0.0
    %400 = vmatprep.mubr.f32.mxu0 0.0
    %401 = vmatmul.mubr.f32.gmra.mxu0 %v335
    %v402 = vpop.f32.mrf.mxu0
    %v403 = vadd.f32 0.0, %v402
    %v404 = vpop.f32.mrf.mxu0
    %405 = vdwg.mxu0
    %vm406 = vcmask 261120
    %407 = vst.msk [vmem:[#allocation2] sm:$0xff] %vm406, %v403
    // Predicated region
    $region10: #{tpu_custom_call.1} parent=1 // pred_check
      _
    $region11: #{tpu_custom_call.1} parent=1 // pred_check_branch
      %409 = sbr.rel (0) target = $region13
    $region12: #{tpu_custom_call.1} parent=1 // pred_region
      %s411 = ssub.s32 128, 128
      %412 = vsyncadd [#allocation3], %s411
      %s414 = sshll.u32 [#allocation2], 4
      %s415 = int_to_ptr.vmem [resolvable:$true] %s414
      %417 = dma.vmem_to_hbm [thread:$0]  %s415, 128, %s2, [#allocation3]
    $region13: #{tpu_custom_call.1} parent=1 // pred_fallthru
      _
    // Predicated region
    $region14: #{tpu_custom_call.1} parent=1 // pred_check
      _
    $region15: #{tpu_custom_call.1} parent=1 // pred_check_branch
      %419 = sbr.rel (0) target = $region17
    $region16: #{tpu_custom_call.1} parent=1 // pred_region
      %420 = dma.done [#allocation3], 128
    $region17: #{tpu_custom_call.1} parent=1 // pred_fallthru
      _
    %421 = vsyncpa [#allocation3], 1

</llo_original>
